<compile_context>
chip_gen: v5e
topology: v5e:2x2
jax: 0.10.0
libtpu: 0.0.40
codegen_flags: <defaults>
</compile_context>

<pallas_src>
import functools

import jax
import jax.numpy as jnp
from jax import lax
from jax.experimental import pallas as pl
from jax.experimental.pallas import tpu as pltpu


def _round_up(v, m):
    return (v + m - 1) // m * m


def _device_vmem_bytes():
    # Introspection only; conservative fallback = v7x per-TC capacity.
    try:
        return int(pltpu.get_tpu_info().vmem_capacity_bytes)
    except Exception:
        return 64 << 20


def _residual_ff_kernel(x_ref, w_ref, b_ref, o_ref, *, d_valid):
    # x_ref: (tm, Dp)  full-feature row tile (LHS + residual source)
    # w_ref: (Dp, tn)  weight column block, [in, out] layout (pre-transposed)
    # b_ref: (1, tn)   bias column block
    # o_ref: (tm, tn)  output block
    j = pl.program_id(0)            # output-feature block index (outer grid axis)
    tn = o_ref.shape[-1]
    dp = x_ref.shape[-1]

    x = x_ref[...]
    if d_valid is not None:
        # Feature dim padded up to a lane multiple: zero the garbage columns of
        # the partial block so they contribute exactly 0 to the contraction
        # (weight pad rows are zero, but garbage * 0 could still produce NaN).
        lane = lax.broadcasted_iota(jnp.int32, x.shape, 1)
        x = jnp.where(lane < d_valid, x, jnp.zeros_like(x))

    # Natural (k, n) contraction against the pre-transposed weight; f32 MXU acc.
    y = jnp.dot(x, w_ref[...], preferred_element_type=jnp.float32)

    # Residual uses the feature columns matching this output block.  Columns
    # beyond the true D only land in output columns that are clipped on writeback.
    if tn == dp:
        x_res = x
    else:
        x_res = x_ref[:, pl.ds(pl.multiple_of(j * tn, 128), tn)]

    out = y + b_ref[...].astype(jnp.float32) + x_res.astype(jnp.float32)
    o_ref[...] = out.astype(o_ref.dtype)   # single downcast, lane-dense store


def _pick_tiles(M, Dp, x_item, w_item, out_item, budget, tm_target):
    # Row tile: amortize per-step overhead / MXU weight pushes, but keep >= 2 row
    # grid steps when M allows so ("parallel",) actually shards across v7x's 2 TCs.
    tm = min(tm_target, max(8, _round_up(pl.cdiv(M, 2), 8)))
    n_lane = Dp // 128

    def col_tiles():   # candidate tn, largest first, always dividing Dp
        for c in range(1, n_lane + 1):
            if n_lane % c == 0:
                yield Dp // c

    while True:
        for tn in col_tiles():
            need = (2 * Dp * tn * w_item        # weight block (2 pipeline buffers)
                    + 2 * tm * Dp * x_item      # x row tiles (double-buffered)
                    + 2 * tm * tn * out_item    # output tiles (double-buffered)
                    + 2 * tn * 4)               # bias
            if need <= budget:
                return tm, tn, need
        if tm <= 8:
            tn = 128
            need = (2 * Dp * tn * w_item + 2 * tm * Dp * x_item
                    + 2 * tm * tn * out_item + 2 * tn * 4)
            return tm, tn, need
        tm = max(8, tm // 2)


def residual_ff(x, weight, bias, *, tm=512, cast_to_bf16=False):
    """ResidualLayer(meta=FeedForwardLayer) forward:  x @ weight.T + bias + x.

    x:      [B, N, D]
    weight: [D, D]   (PyTorch nn.Linear layout: [out_features, in_features])
    bias:   [D]
    """
    B, N, D = x.shape
    out_dim, in_dim = weight.shape
    assert in_dim == D and out_dim == D, "residual requires input_dim == output_dim"
    M = B * N
    Dp = _round_up(D, 128)

    x2d = x.reshape(M, D)
    # One-time [out,in] -> [in,out] transpose (negligible vs the M*D^2 matmul);
    # zero-pad to a lane multiple so padded K rows contribute exactly zero.
    wt = weight.T
    if Dp != D:
        wt = jnp.pad(wt, ((0, Dp - D), (0, Dp - D)))
    b2d = bias.astype(jnp.float32).reshape(1, D)

    if cast_to_bf16 and x2d.dtype == jnp.float32:
        x2d = x2d.astype(jnp.bfloat16)
        wt = wt.astype(jnp.bfloat16)

    out_dtype = x.dtype
    x_item = jnp.dtype(x2d.dtype).itemsize
    w_item = jnp.dtype(wt.dtype).itemsize
    out_item = jnp.dtype(out_dtype).itemsize

    vmem_cap = _device_vmem_bytes()
    budget = vmem_cap - (16 << 20)            # headroom for internal scratch etc.
    tm_eff, tn, need = _pick_tiles(M, Dp, x_item, w_item, out_item, budget, tm)

    n_row = pl.cdiv(M, tm_eff)                # partial last row block handled by Pallas
    n_col = Dp // tn
    vmem_limit = int(min(max(need + (4 << 20), 32 << 20), vmem_cap - (8 << 20)))

    cost = pl.CostEstimate(
        flops=int(2 * n_row * tm_eff * Dp * Dp),
        transcendentals=0,
        bytes_accessed=int(x_item * n_col * M * D + w_item * Dp * Dp
                           + out_item * M * D + 4 * D),
    )

    kernel = functools.partial(_residual_ff_kernel,
                               d_valid=(D if D != Dp else None))

    out2d = pl.pallas_call(
        kernel,
        out_shape=jax.ShapeDtypeStruct((M, D), out_dtype),
        grid_spec=pltpu.PrefetchScalarGridSpec(
            num_scalar_prefetch=0,
            # Column (output-feature) blocks outer, rows inner: the weight block
            # index only changes with j, so it is DMA'd once per column block
            # (total weight HBM traffic = D^2), x row tiles stream underneath.
            grid=(n_col, n_row),
            in_specs=[
                pl.BlockSpec((tm_eff, Dp), lambda j, i: (i, 0)),   # x row tile
                pl.BlockSpec((Dp, tn), lambda j, i: (0, j)),       # weight [in,out]
                pl.BlockSpec((1, tn), lambda j, i: (0, j)),        # bias
            ],
            out_specs=pl.BlockSpec((tm_eff, tn), lambda j, i: (i, j)),
        ),
        compiler_params=pltpu.CompilerParams(
            dimension_semantics=("parallel", "parallel"),
            vmem_limit_bytes=vmem_limit),
        cost_estimate=cost,
    )(x2d, wt, b2d)

    return out2d.reshape(B, N, D)


if __name__ == "__main__":
    # Small shapes consistent with the BxNxD convention of GenericLayer.
    B, N, D = 2, 8, 32

    key = jax.random.PRNGKey(0)
    kx, kw, kb = jax.random.split(key, 3)

    x = jax.random.normal(kx, (B, N, D), dtype=jnp.float32)

    # Deterministic nn.Linear-style init: U(-1/sqrt(D), 1/sqrt(D)).
    bound = 1.0 / (D ** 0.5)
    weight = jax.random.uniform(kw, (D, D), minval=-bound, maxval=bound,
                                dtype=jnp.float32)   # [out, in]
    bias = jax.random.uniform(kb, (D,), minval=-bound, maxval=bound,
                              dtype=jnp.float32)

    out = residual_ff(x, weight, bias)
    out = jax.block_until_ready(out)

    # Pure-JAX reference (full f32 precision) for correctness.
    ref = (jnp.einsum("bnd,od->bno", x, weight,
                      precision=jax.lax.Precision.HIGHEST)
           + bias + x)
    assert out.shape == (B, N, D)
    err = float(jnp.max(jnp.abs(out - ref)))
    # Tolerance covers any reduced-precision MXU pass mode; real layout/bias/
    # residual bugs would show errors O(0.1-1).
    assert err < 1e-2, f"mismatch vs reference: max abs err {err}"

    print("KERNEL_OK")
</pallas_src>

<mosaic_0001>
module attributes {stable_mosaic.version = 11 : i64} {
  func.func @_residual_ff_kernel(%arg0: i32, %arg1: i32, %arg2: memref<8x128xf32, #tpu.memory_space<vmem>>, %arg3: memref<128x128xf32, #tpu.memory_space<vmem>>, %arg4: memref<1x128xf32, #tpu.memory_space<vmem>>, %arg5: memref<8x128xf32, #tpu.memory_space<vmem>>) attributes {dimension_semantics = [#tpu.dimension_semantics<parallel>, #tpu.dimension_semantics<parallel>], iteration_bounds = array<i64: 1, 2>, scalar_prefetch = 0 : i64, scratch_operands = 0 : i64, tpu.core_type = #tpu.core_type<tc>, window_params = [{transform_indices = @transform_0, window_bounds = array<i64: 8, 128>}, {transform_indices = @transform_1, window_bounds = array<i64: 128, 128>}, {transform_indices = @transform_2, window_bounds = array<i64: 1, 128>}, {transform_indices = @transform_3, window_bounds = array<i64: 8, 128>}]} {
    %c0 = arith.constant 0 : index
    %c0_0 = arith.constant 0 : index
    %0 = vector.load %arg2[%c0, %c0_0] : memref<8x128xf32, #tpu.memory_space<vmem>>, vector<8x128xf32>
    %1 = tpu.iota {dimensions = array<i32: 1>} : vector<8x128xi32>
    %c32_i32 = arith.constant 32 : i32
    %2 = vector.broadcast %c32_i32 : i32 to vector<8x128xi32>
    %3 = arith.cmpi slt, %1, %2 : vector<8x128xi32>
    %cst = arith.constant 0.000000e+00 : f32
    %4 = vector.broadcast %cst : f32 to vector<8x128xf32>
    %5 = arith.select %3, %0, %4 : vector<8x128xi1>, vector<8x128xf32>
    %c0_1 = arith.constant 0 : index
    %c0_2 = arith.constant 0 : index
    %6 = vector.load %arg3[%c0_1, %c0_2] : memref<128x128xf32, #tpu.memory_space<vmem>>, vector<128x128xf32>
    %cst_3 = arith.constant dense<0.000000e+00> : vector<8x128xf32>
    %7 = tpu.matmul %5, %6, %cst_3 {dimension_numbers = #tpu.dot_dimension_numbers<[1], [0], [0], [1], [0, 0, 1, 1], [], []>} : vector<8x128xf32>, vector<128x128xf32>, vector<8x128xf32> -> vector<8x128xf32>
    %c0_4 = arith.constant 0 : index
    %c0_5 = arith.constant 0 : index
    %8 = vector.load %arg4[%c0_4, %c0_5] : memref<1x128xf32, #tpu.memory_space<vmem>>, vector<1x128xf32>
    %9 = vector.broadcast %8 : vector<1x128xf32> to vector<8x128xf32>
    %10 = arith.addf %7, %9 : vector<8x128xf32>
    %11 = arith.addf %10, %5 : vector<8x128xf32>
    %c0_6 = arith.constant 0 : index
    %c0_7 = arith.constant 0 : index
    %12 = vector.load %arg5[%c0_6, %c0_7] : memref<8x128xf32, #tpu.memory_space<vmem>>, vector<8x128xf32>
    tpu.vector_store %arg5[%c0_6, %c0_7], %11 {strides = array<i32>} : memref<8x128xf32, #tpu.memory_space<vmem>>, vector<8x128xf32>,
    return
  }
  func.func @transform_0(%arg0: i32, %arg1: i32) -> (i32, i32) {
    %c0_i32 = arith.constant 0 : i32
    %c0_i32_0 = arith.constant 0 : i32
    return %arg1, %c0_i32 : i32, i32
  }
  func.func @transform_1(%arg0: i32, %arg1: i32) -> (i32, i32) {
    %c0_i32 = arith.constant 0 : i32
    %c0_i32_0 = arith.constant 0 : i32
    return %c0_i32, %arg0 : i32, i32
  }
  func.func @transform_2(%arg0: i32, %arg1: i32) -> (i32, i32) {
    %c0_i32 = arith.constant 0 : i32
    %c0_i32_0 = arith.constant 0 : i32
    return %c0_i32, %arg0 : i32, i32
  }
  func.func @transform_3(%arg0: i32, %arg1: i32) -> (i32, i32) {
    %c0_i32 = arith.constant 0 : i32
    return %arg1, %arg0 : i32, i32
  }
}

</mosaic_0001>

<llo_original>
// kernel: tpu_custom_call.1
$region0: #{tpu_custom_call.1}
  #allocation0 [shape = 'u32[]', space=smem, size = 0x4, offset = 0x4, fixed_abs, tag = 'smem constant byte address 0x4 - core index']
  #allocation1 [shape = 'u32[72,128]{1,0:T(1,128)}', space=vmem, size = 0x9000, scoped, tag = 'internal scratch']
  %s0 = inlined_call_operand.hbm [shape: f32[16,32], index: 0, kind: input, shape index: {}]
  %s1 = inlined_call_operand.hbm [shape: f32[128,128], index: 1, kind: input, shape index: {}]
  %s2 = inlined_call_operand.vmem [shape: f32[1,32], index: 2, kind: input, shape index: {}]
  %s3 = inlined_call_operand.hbm [shape: f32[16,32], index: 3, kind: output, shape index: {}]
  %s4 = sld [smem:[#allocation0]]
  $region53: #{tpu_custom_call.1} parent=0
    _
  %s6 = ssub.s32 1, %s4
  %s7 = scalar_select 0, %s6, %s4
  $region1: #{tpu_custom_call.1} parent=0
    #allocation2 [shape = 'u8[8192]{0}', space=vmem, size = 0x2000, scoped, tag = 'input window, operand 0']
    #allocation3 [shape = 's32[2]{0}', space=sflag, size = 0x8, scoped, tag = 'scoped memory for tpu_custom_call.1']
    #allocation4 [shape = 's32[2]{0}', space=sflag, size = 0x8, scoped, tag = 'scoped memory for tpu_custom_call.1']
    #allocation5 [shape = 'u8[65536]{0}', space=vmem, size = 0x10000, scoped, tag = 'input window, operand 1, single buffered']
    #allocation6 [shape = 's32[1]{0}', space=sflag, size = 0x4, scoped, tag = 'scoped memory for tpu_custom_call.1']
    #allocation7 [shape = 'u8[8192]{0}', space=vmem, size = 0x2000, scoped, tag = 'output window, operand 0']
    %8 = vsyncpa [#allocation3], 0
    %s9 = scalar_lea.sflag [#allocation3], 1
    %10 = vsyncpa %s9, 0
    %11 = vsyncpa [#allocation6], 0
    %12 = vsyncpa [#allocation4], 0
    %s13 = scalar_lea.sflag [#allocation4], 1
    %14 = vsyncpa %s13, 0
    loop: start=0, step=1, limit=4
    $region2: #{tpu_custom_call.1} parent=1 // loop_pre_header
      _
    $region3: #{tpu_custom_call.1} parent=1 // loop_header
      %s16 = sphi 0, %s20
      %p17 = scmp.ge.s32.totalorder %s16, 4
      %s23 = sphi 0, %s35
      %s24 = sphi 0, %s31
      %s25 = sphi 0, %s23
      %s26 = sphi 0, %s24
      %s27 = sphi 0, %s25
      %s28 = sphi 0, %s26
      %s38 = sphi 0, %s40
      %s41 = sphi 0, %s38
      %s42 = sphi 0, %s41
      %s58 = sphi 0, %s42
      %s64 = sphi 0, %s66
      %s67 = sphi 0, %s64
      %s68 = sphi 0, %s67
      %s84 = sphi 0, %s68
      %s90 = sphi 0, %s92
      %s93 = sphi 0, %s90
      %s94 = sphi 0, %s93
      %s110 = sphi 0, %s94
      %s118 = sphi 0, %s120
      %s121 = sphi 0, %s118
      %s122 = sphi 0, %s121
      %s138 = sphi 0, %s122
    $region4: #{tpu_custom_call.1} parent=1 // loop_header_branch
      %19 = sbr.rel (%p17) target = $region8
    $region5: #{tpu_custom_call.1} parent=1 // loop_body
      %s21 = ssub.s32 %s16, 1
      %s22 = ssub.s32 %s16, 2
      %s29 = sadd.s32 1, %s24
      %p30 = scmp.ge.s32.totalorder %s29, 2
      %s31 = scalar_select %p30, 0, %s29
      %s32 = sadd.s32 1, %s23
      %s33 = scalar_select %p30, %s32, %s23
      %p34 = scmp.ge.s32.totalorder %s33, 1
      %s35 = scalar_select %p34, 0, %s33
      %s36 = ssub.s32 %s24, %s31
      %p37 = scmp.eq.s32.totalorder %s36, 0
      %s39 = sadd.s32 %s38, 1
      %s40 = scalar_select %p37, %s38, %s39
      %p43 = pneg %p37
      %p44 = scmp.eq.s32.totalorder %s16, 1
      %p45 = por %p43, %p44
      %p46 = scmp.ne.s32.totalorder %s38, %s41
      %p47 = scmp.eq.s32.totalorder %s16, 0
      %p48 = por %p46, %p47
      %p49 = scmp.ne.s32.totalorder %s38, %s41
      %p50 = scmp.eq.s32.totalorder %s21, 1
      %p51 = por %p49, %p50
      %p52 = scmp.ne.s32.totalorder %s41, %s42
      %p53 = scmp.eq.s32.totalorder %s21, 0
      %p54 = por %p52, %p53
      %p55 = scmp.ne.s32.totalorder %s41, %s42
      %p56 = scmp.eq.s32.totalorder %s22, 1
      %p57 = por %p55, %p56
      %p59 = scmp.ne.s32.totalorder %s42, %s58
      %p60 = scmp.eq.s32.totalorder %s22, 0
      %p61 = por %p59, %p60
      %s62 = ssub.s32 %s23, %s35
      %p63 = scmp.eq.s32.totalorder %s62, 0
      %s65 = sadd.s32 %s64, 1
      %s66 = scalar_select %p63, %s64, %s65
      %p69 = pneg %p63
      %p70 = scmp.eq.s32.totalorder %s16, 1
      %p71 = por %p69, %p70
      %p72 = scmp.ne.s32.totalorder %s64, %s67
      %p73 = scmp.eq.s32.totalorder %s16, 0
      %p74 = por %p72, %p73
      %p75 = scmp.ne.s32.totalorder %s64, %s67
      %p76 = scmp.eq.s32.totalorder %s21, 1
      %p77 = por %p75, %p76
      %p78 = scmp.ne.s32.totalorder %s67, %s68
      %p79 = scmp.eq.s32.totalorder %s21, 0
      %p80 = por %p78, %p79
      %p81 = scmp.ne.s32.totalorder %s67, %s68
      %p82 = scmp.eq.s32.totalorder %s22, 1
      %p83 = por %p81, %p82
      %p85 = scmp.ne.s32.totalorder %s68, %s84
      %p86 = scmp.eq.s32.totalorder %s22, 0
      %p87 = por %p85, %p86
      %s88 = ssub.s32 %s23, %s35
      %p89 = scmp.eq.s32.totalorder %s88, 0
      %s91 = sadd.s32 %s90, 1
      %s92 = scalar_select %p89, %s90, %s91
      %p95 = pneg %p89
      %p96 = scmp.eq.s32.totalorder %s16, 1
      %p97 = por %p95, %p96
      %p98 = scmp.ne.s32.totalorder %s90, %s93
      %p99 = scmp.eq.s32.totalorder %s16, 0
      %p100 = por %p98, %p99
      %p101 = scmp.ne.s32.totalorder %s90, %s93
      %p102 = scmp.eq.s32.totalorder %s21, 1
      %p103 = por %p101, %p102
      %p104 = scmp.ne.s32.totalorder %s93, %s94
      %p105 = scmp.eq.s32.totalorder %s21, 0
      %p106 = por %p104, %p105
      %p107 = scmp.ne.s32.totalorder %s93, %s94
      %p108 = scmp.eq.s32.totalorder %s22, 1
      %p109 = por %p107, %p108
      %p111 = scmp.ne.s32.totalorder %s94, %s110
      %p112 = scmp.eq.s32.totalorder %s22, 0
      %p113 = por %p111, %p112
      %s114 = ssub.s32 %s24, %s31
      %s115 = ssub.s32 %s23, %s35
      %s116 = sor.u32 %s114, %s115
      %p117 = scmp.eq.s32.totalorder %s116, 0
      %s119 = sadd.s32 %s118, 1
      %s120 = scalar_select %p117, %s118, %s119
      %p123 = pneg %p117
      %p124 = scmp.eq.s32.totalorder %s16, 1
      %p125 = por %p123, %p124
      %p126 = scmp.ne.s32.totalorder %s118, %s121
      %p127 = scmp.eq.s32.totalorder %s16, 0
      %p128 = por %p126, %p127
      %p129 = scmp.ne.s32.totalorder %s118, %s121
      %p130 = scmp.eq.s32.totalorder %s21, 1
      %p131 = por %p129, %p130
      %p132 = scmp.ne.s32.totalorder %s121, %s122
      %p133 = scmp.eq.s32.totalorder %s21, 0
      %p134 = por %p132, %p133
      %p135 = scmp.ne.s32.totalorder %s121, %s122
      %p136 = scmp.eq.s32.totalorder %s22, 1
      %p137 = por %p135, %p136
      %p139 = scmp.ne.s32.totalorder %s122, %s138
      %p140 = scmp.eq.s32.totalorder %s22, 0
      %p141 = por %p139, %p140
      %p142 = scmp.le.s32.totalorder 1, %s16
      %p143 = scmp.lt.s32.totalorder %s16, 3
      %p144 = pnand %p142, %p143
      %p145 = pneg %p144
      // Predicated region
      $region9: #{tpu_custom_call.1} parent=5 // pred_check
        _
      $region10: #{tpu_custom_call.1} parent=5 // pred_check_branch
        %147 = sbr.rel (%p144) target = $region12
      $region11: #{tpu_custom_call.1} parent=5 // pred_region
        %s148 = ssub.s32 %s16, 1
        // Predicated region
        $region13: #{tpu_custom_call.1} parent=11 // pred_check
          %p149 = pneg %p80
        $region14: #{tpu_custom_call.1} parent=11 // pred_check_branch
          %151 = sbr.rel (%p149) target = $region16
        $region15: #{tpu_custom_call.1} parent=11 // pred_region
          %153 = vsyncadd [#allocation6], 0
          %s154 = smul.addr %s25, 8
          %s155 = scalar_lea.hbm %s1, %s154
          %s156 = sshll.u32 %s155, 4
          %s157 = int_to_ptr.hbm [resolvable:$true] %s156
          %s158 = sshll.u32 [#allocation5], 4
          %s159 = int_to_ptr.vmem [resolvable:$true] %s158
          %164 = dma.hbm_to_vmem [thread:$0]  %s157, 2048, %s159, [#allocation6], 128, 128, 8
        $region16: #{tpu_custom_call.1} parent=11 // pred_fallthru
          _
        // Predicated region
        $region17: #{tpu_custom_call.1} parent=11 // pred_check
          %p165 = pneg %p106
        $region18: #{tpu_custom_call.1} parent=11 // pred_check_branch
          %167 = sbr.rel (%p165) target = $region20
        $region19: #{tpu_custom_call.1} parent=11 // pred_region
          %p168 = scmp.lt.s32.totalorder %s25, 0
          %s169 = scalar_select %p168, %s25, 0
          %s170 = scalar_lea.vmem %s2, %s169
        $region20: #{tpu_custom_call.1} parent=11 // pred_fallthru
          _
      $region12: #{tpu_custom_call.1} parent=5 // pred_fallthru
        _
      %p171 = scmp.lt.s32.totalorder %s16, 2
      // Predicated region
      $region21: #{tpu_custom_call.1} parent=5 // pred_check
        %p172 = pneg %p171
      $region22: #{tpu_custom_call.1} parent=5 // pred_check_branch
        %174 = sbr.rel (%p172) target = $region24
      $region23: #{tpu_custom_call.1} parent=5 // pred_region
        // Predicated region
        $region25: #{tpu_custom_call.1} parent=23 // pred_check
          %p175 = pneg %p48
        $region26: #{tpu_custom_call.1} parent=23 // pred_check_branch
          %177 = sbr.rel (%p175) target = $region28
        $region27: #{tpu_custom_call.1} parent=23 // pred_region
          %s178 = sand.u32 %s38, 1
          %s179 = scalar_lea.sflag [#allocation3], %s178
          %s180 = sand.u32 %s38, 1
          %s181 = smul.addr %s180, 8
          %s182 = scalar_lea.vmem [#allocation2], %s181
          %184 = vsyncadd %s179, 0
          %s185 = smul.addr %s24, 8
          %s186 = scalar_lea.hbm %s0, %s185
          %s188 = sshll.u32 %s186, 4
          %s189 = int_to_ptr.hbm [resolvable:$true] %s188
          %s190 = sshll.u32 %s182, 4
          %s191 = int_to_ptr.vmem [resolvable:$true] %s190
          %193 = dma.hbm_to_vmem [thread:$0]  %s189, 128, %s191, %s179
        $region28: #{tpu_custom_call.1} parent=23 // pred_fallthru
          _
      $region24: #{tpu_custom_call.1} parent=5 // pred_fallthru
        _
      %p194 = scmp.le.s32.totalorder 1, %s16
      %p195 = scmp.lt.s32.totalorder %s16, 3
      %p196 = pnand %p194, %p195
      %p197 = pneg %p196
      // Predicated region
      $region29: #{tpu_custom_call.1} parent=5 // pred_check
        _
      $region30: #{tpu_custom_call.1} parent=5 // pred_check_branch
        %199 = sbr.rel (%p196) target = $region32
      $region31: #{tpu_custom_call.1} parent=5 // pred_region
        %s200 = ssub.s32 %s16, 1
        %s201 = sand.u32 %s41, 1
        %s202 = scalar_lea.sflag [#allocation3], %s201
        %s203 = sand.u32 %s41, 1
        %s204 = smul.addr %s203, 8
        %s205 = scalar_lea.vmem [#allocation2], %s204
        // Predicated region
        $region33: #{tpu_custom_call.1} parent=31 // pred_check
          %p206 = pneg %p54
        $region34: #{tpu_custom_call.1} parent=31 // pred_check_branch
          %208 = sbr.rel (%p206) target = $region36
        $region35: #{tpu_custom_call.1} parent=31 // pred_region
          %210 = dma.done %s202, 128
        $region36: #{tpu_custom_call.1} parent=31 // pred_fallthru
          _
        // Predicated region
        $region37: #{tpu_custom_call.1} parent=31 // pred_check
          %p211 = pneg %p80
        $region38: #{tpu_custom_call.1} parent=31 // pred_check_branch
          %213 = sbr.rel (%p211) target = $region40
        $region39: #{tpu_custom_call.1} parent=31 // pred_region
          %215 = dma.done [#allocation6], 2048
        $region40: #{tpu_custom_call.1} parent=31 // pred_fallthru
          _
        %s216 = sand.u32 %s41, 1
        %s217 = scalar_lea.sflag [#allocation3], %s216
        %s218 = sand.u32 %s41, 1
        %s219 = smul.addr %s218, 8
        %s220 = scalar_lea.vmem [#allocation2], %s219
        %p221 = pneg %p54
        %p222 = pneg %p51
        %p223 = pneg %p80
        %p224 = pneg %p77
        %p225 = scmp.lt.s32.totalorder %s25, 0
        %s226 = scalar_select %p225, %s25, 0
        %s227 = scalar_lea.vmem %s2, %s226
        %p228 = pneg %p106
        %p229 = pneg %p103
        %p230 = pneg %p134
        %p231 = pneg %p131
        %s232 = sand.u32 %s121, 1
        %s233 = scalar_lea.sflag [#allocation4], %s232
        %s234 = sand.u32 %s121, 1
        %s235 = smul.addr %s234, 8
        %s236 = scalar_lea.vmem [#allocation7], %s235
        %p237 = scmp.lt.s32.totalorder %s25, 0
        %s238 = scalar_select %p237, %s25, 0
        %s239 = scalar_lea.vmem %s2, %s238
        %v240 = vld [vmem:[%s205] sm:$0xff]
        %v241 = vlaneseq
        %v242 = vand.u32 %v241, 127
        %vm243 = vcmp.lt.s32.totalorder %v242, 32
        %v244 = vsel %vm243, %v240, 0.0
        %v245 = vld [vmem:[#allocation5] sm:$0xff]
        %v246 = vld [vmem:[#allocation5 + $0x8] sm:$0xff]
        %v247 = vld [vmem:[#allocation5 + $0x10] sm:$0xff]
        %v248 = vld [vmem:[#allocation5 + $0x18] sm:$0xff]
        %v249 = vld [vmem:[#allocation5 + $0x20] sm:$0xff]
        %v250 = vld [vmem:[#allocation5 + $0x28] sm:$0xff]
        %v251 = vld [vmem:[#allocation5 + $0x30] sm:$0xff]
        %v252 = vld [vmem:[#allocation5 + $0x38] sm:$0xff]
        %v253 = vld [vmem:[#allocation5 + $0x40] sm:$0xff]
        %v254 = vld [vmem:[#allocation5 + $0x48] sm:$0xff]
        %v255 = vld [vmem:[#allocation5 + $0x50] sm:$0xff]
        %v256 = vld [vmem:[#allocation5 + $0x58] sm:$0xff]
        %v257 = vld [vmem:[#allocation5 + $0x60] sm:$0xff]
        %v258 = vld [vmem:[#allocation5 + $0x68] sm:$0xff]
        %v259 = vld [vmem:[#allocation5 + $0x70] sm:$0xff]
        %v260 = vld [vmem:[#allocation5 + $0x78] sm:$0xff]
        %v261 = vld [vmem:[%s239] sm:$0x1]
        %v263 = vperm.slane %v261, 0
        %265 = vmatpush.msra.mxu0 %v260
        %266 = vmatpush.msra.mxu0 %v259
        %267 = vmatpush.msra.mxu0 %v258
        %268 = vmatpush.msra.mxu0 %v257
        %269 = vmatpush.msra.mxu0 %v256
        %270 = vmatpush.msra.mxu0 %v255
        %271 = vmatpush.msra.mxu0 %v254
        %272 = vmatpush.msra.mxu0 %v253
        %273 = vmatpush.msra.mxu0 %v252
        %274 = vmatpush.msra.mxu0 %v251
        %275 = vmatpush.msra.mxu0 %v250
        %276 = vmatpush.msra.mxu0 %v249
        %277 = vmatpush.msra.mxu0 %v248
        %278 = vmatpush.msra.mxu0 %v247
        %279 = vmatpush.msra.mxu0 %v246
        %280 = vmatpush.msra.mxu0 %v245
        %281 = vmatmul.f32.gmra.mxu0 %v244
        %v282 = vpop.f32.mrf.mxu0
        %v283 = vadd.f32 %v263, %v282
        %284 = vdwg.mxu0
        %v285 = vadd.f32 %v283, %v244
        %286 = vst [vmem:[%s236] sm:$0xff] %v285
        %s287 = sand.u32 %s121, 1
        %s288 = scalar_lea.sflag [#allocation4], %s287
        %s289 = sand.u32 %s121, 1
        %s290 = smul.addr %s289, 8
        %s291 = scalar_lea.vmem [#allocation7], %s290
        // Predicated region
        $region41: #{tpu_custom_call.1} parent=31 // pred_check
          %p292 = pneg %p131
        $region42: #{tpu_custom_call.1} parent=31 // pred_check_branch
          %294 = sbr.rel (%p292) target = $region44
        $region43: #{tpu_custom_call.1} parent=31 // pred_region
          %296 = vsyncadd %s288, 0
          %s297 = sadd.s32 %s25, %s26
          %s298 = smul.addr %s297, 8
          %s299 = scalar_lea.hbm %s3, %s298
          %s301 = sshll.u32 %s291, 4
          %s302 = int_to_ptr.vmem [resolvable:$true] %s301
          %s303 = sshll.u32 %s299, 4
          %s304 = int_to_ptr.hbm [resolvable:$true] %s303
          %306 = dma.vmem_to_hbm [thread:$0]  %s302, 128, %s304, %s288
        $region44: #{tpu_custom_call.1} parent=31 // pred_fallthru
          _
      $region32: #{tpu_custom_call.1} parent=5 // pred_fallthru
        _
      %p307 = scmp.le.s32.totalorder 2, %s16
      // Predicated region
      $region45: #{tpu_custom_call.1} parent=5 // pred_check
        %p308 = pneg %p307
      $region46: #{tpu_custom_call.1} parent=5 // pred_check_branch
        %310 = sbr.rel (%p308) target = $region48
      $region47: #{tpu_custom_call.1} parent=5 // pred_region
        %s311 = ssub.s32 %s16, 2
        // Predicated region
        $region49: #{tpu_custom_call.1} parent=47 // pred_check
          %p312 = pneg %p137
        $region50: #{tpu_custom_call.1} parent=47 // pred_check_branch
          %314 = sbr.rel (%p312) target = $region52
        $region51: #{tpu_custom_call.1} parent=47 // pred_region
          %s315 = sand.u32 %s122, 1
          %s316 = scalar_lea.sflag [#allocation4], %s315
          %s317 = sand.u32 %s122, 1
          %s318 = smul.addr %s317, 8
          %s319 = scalar_lea.vmem [#allocation7], %s318
          %321 = dma.done %s316, 128
        $region52: #{tpu_custom_call.1} parent=47 // pred_fallthru
          _
      $region48: #{tpu_custom_call.1} parent=5 // pred_fallthru
        _
    $region6: #{tpu_custom_call.1} parent=1 // loop_footer
      %s20 = sadd.s32 1, %s16
    $region7: #{tpu_custom_call.1} parent=1 // loop_footer_branch
      %15 = sbr.rel target = $region3
    $region8: #{tpu_custom_call.1} parent=1 // loop_exit
      _
    %322 = vsyncpa [#allocation3], 1
    %s323 = scalar_lea.sflag [#allocation3], 1
    %324 = vsyncpa %s323, 1
    %325 = vsyncpa [#allocation6], 1
    %326 = vsyncpa [#allocation4], 1
    %s327 = scalar_lea.sflag [#allocation4], 1
    %328 = vsyncpa %s327, 1

</llo_original>
